<compile_context>
chip_gen: v6e
topology: v6e:2x2x1
jax: 0.10.0
libtpu: 0.0.40
codegen_flags: <defaults>
</compile_context>

<pallas_src>
import functools

import jax
import jax.numpy as jnp
from jax import lax
from jax.experimental import pallas as pl
from jax.experimental.pallas import tpu as pltpu


def _reward_predictor_kernel(x_ref, w1_ref, b1_ref, w2_ref, b2_ref,
                             w3c_ref, b3_ref, o_ref, *, mxu_dtype):
    # x tile arrives batch-major (tb, in_dim); contract on in_dim so every
    # activation is feature-major (features on sublanes, batch on lanes).
    x = x_ref[...].astype(mxu_dtype)                          # (tb, in_dim)
    w1 = w1_ref[...].astype(mxu_dtype)                        # (64, in_dim)

    # Layer 1: (64, in_dim) . (tb, in_dim)^T -> (64, tb); f32 accumulation,
    # f32 bias + ReLU.
    h1 = lax.dot_general(w1, x, (((1,), (1,)), ((), ())),
                         preferred_element_type=jnp.float32)
    h1 = jnp.maximum(h1 + b1_ref[...], 0.0)                   # (64, tb) f32

    # Layer 2: (32, 64) @ (64, tb) -> (32, tb).
    h2 = jnp.dot(w2_ref[...].astype(mxu_dtype), h1.astype(mxu_dtype),
                 preferred_element_type=jnp.float32)
    h2 = jnp.maximum(h2 + b2_ref[...], 0.0)                   # (32, tb) f32

    # Layer 3 (M=1) on the VPU/XLU: broadcast-MAC over the 32 feature rows
    # plus a sublane reduce -- avoids full 8-row vmatmul pushes for M=1.
    logits = jnp.sum(w3c_ref[...] * h2, axis=0, keepdims=True)  # (1, tb)
    o_ref[...] = jax.nn.sigmoid(logits + b3_ref[...]).astype(o_ref.dtype)


def reward_predictor_forward(x, params, *, block_b=16384,
                             mxu_dtype=jnp.bfloat16,
                             vmem_limit_bytes=48 * 1024 * 1024):
    """x: (B, obs_size + act_size) -> (B, 1), matching PyTorch RewardPredictor.

    params = (w1, b1, w2, b2, w3, b3) with weights in PyTorch (out, in) layout
    and biases stored as (out, 1) columns.
    """
    w1, b1, w2, b2, w3, b3 = params
    B, in_dim = x.shape

    # Tiny one-time param prep (negligible bytes): layer-3 weight as a (32, 1)
    # column so the kernel's VPU path can broadcast it over the batch lanes.
    w3c = w3.reshape(w3.shape[1], 1)

    # Batch tile: as large as VMEM comfortably allows to amortize per-step
    # overhead.  Ragged last tile is handled by Pallas masked writes, so x is
    # never padded or copied in HBM.
    if B > block_b:
        tb = block_b
    elif B >= 2048 and B % 256 == 0:
        tb = B // 2   # >=2 grid steps so the "parallel" axis feeds both v7x TCs
    else:
        tb = B
    grid = (pl.cdiv(B, tb),)

    def resident(arr):
        # Constant block index -> DMA'd once, stays resident in VMEM.
        return pl.BlockSpec(arr.shape, lambda i: (0, 0))

    flops = 2 * B * (in_dim * 64 + 64 * 32 + 32 * 1)
    bytes_accessed = (B * in_dim * x.dtype.itemsize + B * 4 +
                      sum(int(p.size) * p.dtype.itemsize for p in params))

    out = pl.pallas_call(
        functools.partial(_reward_predictor_kernel, mxu_dtype=mxu_dtype),
        out_shape=jax.ShapeDtypeStruct((1, B), jnp.float32),
        grid=grid,
        in_specs=[
            pl.BlockSpec((tb, in_dim), lambda i: (i, 0)),   # streamed x tile
            resident(w1), resident(b1),
            resident(w2), resident(b2),
            resident(w3c), resident(b3),
        ],
        out_specs=pl.BlockSpec((1, tb), lambda i: (0, i)),  # lane-dense output
        compiler_params=pltpu.CompilerParams(
            dimension_semantics=("parallel",),
            vmem_limit_bytes=vmem_limit_bytes),
        cost_estimate=pl.CostEstimate(
            flops=flops, transcendentals=B, bytes_accessed=bytes_accessed),
    )(x, w1, b1, w2, b2, w3c, b3)

    return out.reshape(B, 1)


def init_params(key, obs_size, act_size):
    """PyTorch nn.Linear-style init: U[-1/sqrt(fan_in), 1/sqrt(fan_in)].

    Weights stored (out_features, in_features) (PyTorch layout); biases (out, 1).
    """
    in_dim = obs_size + act_size
    dims = [(in_dim, 64), (64, 32), (32, 1)]
    params = []
    for fan_in, fan_out in dims:
        key, kw, kb = jax.random.split(key, 3)
        bound = 1.0 / (fan_in ** 0.5)
        w = jax.random.uniform(kw, (fan_out, fan_in), jnp.float32, -bound, bound)
        b = jax.random.uniform(kb, (fan_out, 1), jnp.float32, -bound, bound)
        params.extend([w, b])
    return tuple(params)


def reward_predictor_reference(x, params):
    w1, b1, w2, b2, w3, b3 = params
    h1 = jnp.maximum(x @ w1.T + b1.T, 0.0)
    h2 = jnp.maximum(h1 @ w2.T + b2.T, 0.0)
    return jax.nn.sigmoid(h2 @ w3.T + b3.T)


if __name__ == "__main__":
    obs_size, act_size = 24, 8     # in_dim = 32
    batch = 8

    key = jax.random.PRNGKey(0)
    key, kx = jax.random.split(key)
    x = jax.random.normal(kx, (batch, obs_size + act_size), jnp.float32)
    params = init_params(key, obs_size, act_size)
    ref = reward_predictor_reference(x, params)

    # 1) Bit-accurate path (f32 MXU operands): tight tolerance.
    out_f32 = jax.block_until_ready(
        reward_predictor_forward(x, params, mxu_dtype=jnp.float32))
    assert out_f32.shape == (batch, 1)
    assert bool(jnp.all((out_f32 >= 0.0) & (out_f32 <= 1.0)))
    assert bool(jnp.max(jnp.abs(out_f32 - ref)) < 1e-5)

    # 2) Production default (bf16 MXU operands, f32 accumulation/epilogue).
    out_bf16 = jax.block_until_ready(reward_predictor_forward(x, params))
    assert out_bf16.shape == (batch, 1)
    assert bool(jnp.max(jnp.abs(out_bf16 - ref)) < 2e-2)

    # 3) Multi-tile grid (forced tiny block_b): exact division.
    key, kx2 = jax.random.split(key)
    x2 = jax.random.normal(kx2, (384, obs_size + act_size), jnp.float32)
    ref2 = reward_predictor_reference(x2, params)
    out2 = jax.block_until_ready(
        reward_predictor_forward(x2, params, block_b=128))
    assert out2.shape == (384, 1)
    assert bool(jnp.max(jnp.abs(out2 - ref2)) < 2e-2)

    # 4) Ragged last tile (300 % 128 != 0): masked tail, no wrapper-side pad.
    key, kx3 = jax.random.split(key)
    x3 = jax.random.normal(kx3, (300, obs_size + act_size), jnp.float32)
    ref3 = reward_predictor_reference(x3, params)
    out3 = jax.block_until_ready(
        reward_predictor_forward(x3, params, block_b=128))
    assert out3.shape == (300, 1)
    assert bool(jnp.max(jnp.abs(out3 - ref3)) < 2e-2)

    # 5) Single-tile batch large enough to trigger the 2-way megacore split.
    key, kx4 = jax.random.split(key)
    x4 = jax.random.normal(kx4, (2048, obs_size + act_size), jnp.float32)
    ref4 = reward_predictor_reference(x4, params)
    out4 = jax.block_until_ready(reward_predictor_forward(x4, params))
    assert out4.shape == (2048, 1)
    assert bool(jnp.max(jnp.abs(out4 - ref4)) < 2e-2)

    print("KERNEL_OK")
</pallas_src>

<mosaic_0001>
module attributes {stable_mosaic.version = 11 : i64} {
  func.func @_reward_predictor_kernel(%arg0: i32, %arg1: memref<8x32xf32, #tpu.memory_space<vmem>>, %arg2: memref<64x32xf32, #tpu.memory_space<vmem>>, %arg3: memref<64x1xf32, #tpu.memory_space<vmem>>, %arg4: memref<32x64xf32, #tpu.memory_space<vmem>>, %arg5: memref<32x1xf32, #tpu.memory_space<vmem>>, %arg6: memref<32x1xf32, #tpu.memory_space<vmem>>, %arg7: memref<1x1xf32, #tpu.memory_space<vmem>>, %arg8: memref<1x8xf32, #tpu.memory_space<vmem>>) attributes {dimension_semantics = [#tpu.dimension_semantics<parallel>], iteration_bounds = array<i64: 1>, scalar_prefetch = 0 : i64, scratch_operands = 0 : i64, tpu.core_type = #tpu.core_type<tc>, window_params = [{transform_indices = @transform_0, window_bounds = array<i64: 8, 32>}, {pipeline_mode = #tpu.pipeline_mode<synchronous>, transform_indices = @transform_1, window_bounds = array<i64: 64, 32>}, {pipeline_mode = #tpu.pipeline_mode<synchronous>, transform_indices = @transform_2, window_bounds = array<i64: 64, 1>}, {pipeline_mode = #tpu.pipeline_mode<synchronous>, transform_indices = @transform_3, window_bounds = array<i64: 32, 64>}, {pipeline_mode = #tpu.pipeline_mode<synchronous>, transform_indices = @transform_4, window_bounds = array<i64: 32, 1>}, {pipeline_mode = #tpu.pipeline_mode<synchronous>, transform_indices = @transform_5, window_bounds = array<i64: 32, 1>}, {pipeline_mode = #tpu.pipeline_mode<synchronous>, transform_indices = @transform_6, window_bounds = array<i64: 1, 1>}, {transform_indices = @transform_7, window_bounds = array<i64: 1, 8>}]} {
    %c0 = arith.constant 0 : index
    %c0_0 = arith.constant 0 : index
    %0 = vector.load %arg1[%c0, %c0_0] : memref<8x32xf32, #tpu.memory_space<vmem>>, vector<8x32xf32>
    %c0_1 = arith.constant 0 : index
    %c0_2 = arith.constant 0 : index
    %1 = vector.load %arg2[%c0_1, %c0_2] : memref<64x32xf32, #tpu.memory_space<vmem>>, vector<64x32xf32>
    %cst = arith.constant dense<0.000000e+00> : vector<64x8xf32>
    %2 = tpu.matmul %1, %0, %cst {dimension_numbers = #tpu.dot_dimension_numbers<[1], [1], [0], [0], [0, 0, 1, 0], [], []>} : vector<64x32xf32>, vector<8x32xf32>, vector<64x8xf32> -> vector<64x8xf32>
    %c0_3 = arith.constant 0 : index
    %c0_4 = arith.constant 0 : index
    %3 = vector.load %arg3[%c0_3, %c0_4] : memref<64x1xf32, #tpu.memory_space<vmem>>, vector<64x1xf32>
    %4 = vector.broadcast %3 : vector<64x1xf32> to vector<64x8xf32>
    %5 = arith.addf %2, %4 : vector<64x8xf32>
    %cst_5 = arith.constant 0.000000e+00 : f32
    %6 = vector.broadcast %cst_5 : f32 to vector<64x8xf32>
    %7 = arith.maximumf %5, %6 : vector<64x8xf32>
    %c0_6 = arith.constant 0 : index
    %c0_7 = arith.constant 0 : index
    %8 = vector.load %arg4[%c0_6, %c0_7] : memref<32x64xf32, #tpu.memory_space<vmem>>, vector<32x64xf32>
    %cst_8 = arith.constant dense<0.000000e+00> : vector<32x8xf32>
    %9 = tpu.matmul %8, %7, %cst_8 {dimension_numbers = #tpu.dot_dimension_numbers<[1], [0], [0], [1], [0, 0, 1, 1], [], []>} : vector<32x64xf32>, vector<64x8xf32>, vector<32x8xf32> -> vector<32x8xf32>
    %c0_9 = arith.constant 0 : index
    %c0_10 = arith.constant 0 : index
    %10 = vector.load %arg5[%c0_9, %c0_10] : memref<32x1xf32, #tpu.memory_space<vmem>>, vector<32x1xf32>
    %11 = vector.broadcast %10 : vector<32x1xf32> to vector<32x8xf32>
    %12 = arith.addf %9, %11 : vector<32x8xf32>
    %cst_11 = arith.constant 0.000000e+00 : f32
    %13 = vector.broadcast %cst_11 : f32 to vector<32x8xf32>
    %14 = arith.maximumf %12, %13 : vector<32x8xf32>
    %c0_12 = arith.constant 0 : index
    %c0_13 = arith.constant 0 : index
    %15 = vector.load %arg6[%c0_12, %c0_13] : memref<32x1xf32, #tpu.memory_space<vmem>>, vector<32x1xf32>
    %16 = vector.broadcast %15 : vector<32x1xf32> to vector<32x8xf32>
    %17 = arith.mulf %16, %14 : vector<32x8xf32>
    %cst_14 = arith.constant dense<0.000000e+00> : vector<8xf32>
    %18 = vector.multi_reduction <add>, %17, %cst_14 [0] : vector<32x8xf32> to vector<8xf32>
    %19 = vector.shape_cast %18 : vector<8xf32> to vector<1x8xf32>
    %c0_15 = arith.constant 0 : index
    %c0_16 = arith.constant 0 : index
    %20 = vector.load %arg7[%c0_15, %c0_16] : memref<1x1xf32, #tpu.memory_space<vmem>>, vector<1x1xf32>
    %21 = vector.broadcast %20 : vector<1x1xf32> to vector<1x8xf32>
    %22 = arith.addf %19, %21 : vector<1x8xf32>
    %23 = arith.negf %22 : vector<1x8xf32>
    %24 = math.exp %23 : vector<1x8xf32>
    %cst_17 = arith.constant 1.000000e+00 : f32
    %25 = vector.broadcast %cst_17 : f32 to vector<1x8xf32>
    %26 = arith.addf %25, %24 : vector<1x8xf32>
    %27 = arith.divf %25, %26 : vector<1x8xf32>
    %c0_18 = arith.constant 0 : index
    %c0_19 = arith.constant 0 : index
    %28 = vector.load %arg8[%c0_18, %c0_19] : memref<1x8xf32, #tpu.memory_space<vmem>>, vector<1x8xf32>
    tpu.vector_store %arg8[%c0_18, %c0_19], %27 {strides = array<i32>} : memref<1x8xf32, #tpu.memory_space<vmem>>, vector<1x8xf32>,
    return
  }
  func.func @transform_0(%arg0: i32) -> (i32, i32) {
    %c0_i32 = arith.constant 0 : i32
    %c0_i32_0 = arith.constant 0 : i32
    return %arg0, %c0_i32 : i32, i32
  }
  func.func @transform_1(%arg0: i32) -> (i32, i32) {
    %c0_i32 = arith.constant 0 : i32
    %c0_i32_0 = arith.constant 0 : i32
    %c0_i32_1 = arith.constant 0 : i32
    return %c0_i32, %c0_i32_0 : i32, i32
  }
  func.func @transform_2(%arg0: i32) -> (i32, i32) {
    %c0_i32 = arith.constant 0 : i32
    %c0_i32_0 = arith.constant 0 : i32
    %c0_i32_1 = arith.constant 0 : i32
    return %c0_i32, %c0_i32_0 : i32, i32
  }
  func.func @transform_3(%arg0: i32) -> (i32, i32) {
    %c0_i32 = arith.constant 0 : i32
    %c0_i32_0 = arith.constant 0 : i32
    %c0_i32_1 = arith.constant 0 : i32
    return %c0_i32, %c0_i32_0 : i32, i32
  }
  func.func @transform_4(%arg0: i32) -> (i32, i32) {
    %c0_i32 = arith.constant 0 : i32
    %c0_i32_0 = arith.constant 0 : i32
    %c0_i32_1 = arith.constant 0 : i32
    return %c0_i32, %c0_i32_0 : i32, i32
  }
  func.func @transform_5(%arg0: i32) -> (i32, i32) {
    %c0_i32 = arith.constant 0 : i32
    %c0_i32_0 = arith.constant 0 : i32
    %c0_i32_1 = arith.constant 0 : i32
    return %c0_i32, %c0_i32_0 : i32, i32
  }
  func.func @transform_6(%arg0: i32) -> (i32, i32) {
    %c0_i32 = arith.constant 0 : i32
    %c0_i32_0 = arith.constant 0 : i32
    %c0_i32_1 = arith.constant 0 : i32
    return %c0_i32, %c0_i32_0 : i32, i32
  }
  func.func @transform_7(%arg0: i32) -> (i32, i32) {
    %c0_i32 = arith.constant 0 : i32
    %c0_i32_0 = arith.constant 0 : i32
    return %c0_i32, %arg0 : i32, i32
  }
}

</mosaic_0001>

<llo_original>
// kernel: tpu_custom_call.1
$region0: #{tpu_custom_call.1}
  #allocation0 [shape = 'u32[]', space=smem, size = 0x4, offset = 0x4, fixed_abs, tag = 'smem constant byte address 0x4 - core index']
  #allocation1 [shape = 'u32[144,128]{1,0:T(1,128)}', space=vmem, size = 0x12000, scoped, tag = 'internal scratch']
  #allocation2 [shape = 'f32[1,1]{1,0:T(1,128)S(1)}', space=vmem, size = 0x200, scoped, tag = 'scoped memory for tpu_custom_call.1']
  %s0 = inlined_call_operand.vmem [shape: f32[8,32], index: 0, kind: input, shape index: {}]
  %s1 = inlined_call_operand.vmem [shape: f32[64,32], index: 1, kind: input, shape index: {}]
  %s2 = inlined_call_operand.vmem [shape: f32[64,1], index: 2, kind: input, shape index: {}]
  %s3 = inlined_call_operand.vmem [shape: f32[32,64], index: 3, kind: input, shape index: {}]
  %s4 = inlined_call_operand.vmem [shape: f32[32,1], index: 4, kind: input, shape index: {}]
  %s5 = inlined_call_operand.vmem [shape: f32[32,1], index: 5, kind: input, shape index: {}]
  %s6 = inlined_call_operand.<no memory space> [shape: f32[1,1], index: 6, kind: input, shape index: {}]
  %s7 = inlined_call_operand.hbm [shape: f32[1,8], index: 7, kind: output, shape index: {}]
  %s8 = sld [smem:[#allocation0]]
  $region38: #{tpu_custom_call.1} parent=0
    _
  %s10 = ssub.s32 1, %s8
  %s11 = scalar_select 0, %s10, %s8
  %v12 = vstv %s6
  %13 = vst [vmem:[#allocation2] sm:$0x1] %v12
  $region1: #{tpu_custom_call.1} parent=0
    #allocation3 [shape = 'u8[512]{0}', space=vmem, size = 0x400, scoped, tag = 'output window, operand 0, single buffered']
    #allocation4 [shape = 's32[1]{0}', space=sflag, size = 0x4, scoped, tag = 'scoped memory for tpu_custom_call.1']
    %14 = vsyncpa [#allocation4], 0
    // Predicated region
    $region2: #{tpu_custom_call.1} parent=1 // pred_check
      _
    $region3: #{tpu_custom_call.1} parent=1 // pred_check_branch
      %16 = sbr.rel (0) target = $region5
    $region4: #{tpu_custom_call.1} parent=1 // pred_region
      _
    $region5: #{tpu_custom_call.1} parent=1 // pred_fallthru
      _
    // Predicated region
    $region6: #{tpu_custom_call.1} parent=1 // pred_check
      _
    $region7: #{tpu_custom_call.1} parent=1 // pred_check_branch
      %18 = sbr.rel (0) target = $region9
    $region8: #{tpu_custom_call.1} parent=1 // pred_region
      _
    $region9: #{tpu_custom_call.1} parent=1 // pred_fallthru
      _
    // Predicated region
    $region10: #{tpu_custom_call.1} parent=1 // pred_check
      _
    $region11: #{tpu_custom_call.1} parent=1 // pred_check_branch
      %20 = sbr.rel (0) target = $region13
    $region12: #{tpu_custom_call.1} parent=1 // pred_region
      _
    $region13: #{tpu_custom_call.1} parent=1 // pred_fallthru
      _
    // Predicated region
    $region14: #{tpu_custom_call.1} parent=1 // pred_check
      _
    $region15: #{tpu_custom_call.1} parent=1 // pred_check_branch
      %22 = sbr.rel (0) target = $region17
    $region16: #{tpu_custom_call.1} parent=1 // pred_region
      _
    $region17: #{tpu_custom_call.1} parent=1 // pred_fallthru
      _
    // Predicated region
    $region18: #{tpu_custom_call.1} parent=1 // pred_check
      _
    $region19: #{tpu_custom_call.1} parent=1 // pred_check_branch
      %24 = sbr.rel (0) target = $region21
    $region20: #{tpu_custom_call.1} parent=1 // pred_region
      _
    $region21: #{tpu_custom_call.1} parent=1 // pred_fallthru
      _
    // Predicated region
    $region22: #{tpu_custom_call.1} parent=1 // pred_check
      _
    $region23: #{tpu_custom_call.1} parent=1 // pred_check_branch
      %26 = sbr.rel (0) target = $region25
    $region24: #{tpu_custom_call.1} parent=1 // pred_region
      _
    $region25: #{tpu_custom_call.1} parent=1 // pred_fallthru
      _
    // Predicated region
    $region26: #{tpu_custom_call.1} parent=1 // pred_check
      _
    $region27: #{tpu_custom_call.1} parent=1 // pred_check_branch
      %28 = sbr.rel (0) target = $region29
    $region28: #{tpu_custom_call.1} parent=1 // pred_region
      _
    $region29: #{tpu_custom_call.1} parent=1 // pred_fallthru
      _
    %v29 = vld [vmem:[%s0] sm:$0xff]
    %v30 = vld [vmem:[%s1] sm:$0xff]
    %v31 = vld [vmem:[%s1 + $0x8] sm:$0xff]
    %v32 = vld [vmem:[%s1 + $0x10] sm:$0xff]
    %v33 = vld [vmem:[%s1 + $0x18] sm:$0xff]
    %v34 = vld [vmem:[%s1 + $0x20] sm:$0xff]
    %v35 = vld [vmem:[%s1 + $0x28] sm:$0xff]
    %v36 = vld [vmem:[%s1 + $0x30] sm:$0xff]
    %v37 = vld [vmem:[%s1 + $0x38] sm:$0xff]
    %v38 = vld [vmem:[%s2] sm:$0xff]
    %v39 = vld [vmem:[%s2 + $0x8] sm:$0xff]
    %v40 = vld [vmem:[%s2 + $0x10] sm:$0xff]
    %v41 = vld [vmem:[%s2 + $0x18] sm:$0xff]
    %v42 = vld [vmem:[%s2 + $0x20] sm:$0xff]
    %v43 = vld [vmem:[%s2 + $0x28] sm:$0xff]
    %v44 = vld [vmem:[%s2 + $0x30] sm:$0xff]
    %v45 = vld [vmem:[%s2 + $0x38] sm:$0xff]
    %47 = vset.pattern.permute.xlu0 0
    %48 = vperm.xlu0 %47, %v38
    %v49 = vpop.permute.xlu0 %48
    %52 = vset.pattern.permute.xlu0 0
    %53 = vperm.xlu0 %52, %v39
    %v54 = vpop.permute.xlu0 %53
    %57 = vset.pattern.permute.xlu0 0
    %58 = vperm.xlu0 %57, %v40
    %v59 = vpop.permute.xlu0 %58
    %62 = vset.pattern.permute.xlu0 0
    %63 = vperm.xlu0 %62, %v41
    %v64 = vpop.permute.xlu0 %63
    %67 = vset.pattern.permute.xlu0 0
    %68 = vperm.xlu0 %67, %v42
    %v69 = vpop.permute.xlu0 %68
    %72 = vset.pattern.permute.xlu0 0
    %73 = vperm.xlu0 %72, %v43
    %v74 = vpop.permute.xlu0 %73
    %77 = vset.pattern.permute.xlu0 0
    %78 = vperm.xlu0 %77, %v44
    %v79 = vpop.permute.xlu0 %78
    %82 = vset.pattern.permute.xlu0 0
    %83 = vperm.xlu0 %82, %v45
    %v84 = vpop.permute.xlu0 %83
    %vm86 = vcmask 261120
    %v88 = vsel %vm86, %v30, 0
    %v91 = vsel %vm86, %v31, 0
    %v94 = vsel %vm86, %v32, 0
    %v97 = vsel %vm86, %v33, 0
    %v100 = vsel %vm86, %v34, 0
    %v103 = vsel %vm86, %v35, 0
    %v106 = vsel %vm86, %v36, 0
    %v109 = vsel %vm86, %v37, 0
    %v112 = vsel %vm86, %v29, 0
    %114 = vmatprep.subr.mxu0 0.0
    %115 = vmatpush1.xpose.msra.mxu0 0.0
    %116 = vmatprep.subr.mxu0 0.0
    %117 = vmatpush1.xpose.msra.mxu0 0.0
    %118 = vmatprep.subr.mxu0 0.0
    %119 = vmatpush1.xpose.msra.mxu0 0.0
    %120 = vmatprep.subr.mxu0 0.0
    %121 = vmatpush1.xpose.msra.mxu0 0.0
    %122 = vmatprep.subr.mxu0 0.0
    %123 = vmatpush1.xpose.msra.mxu0 0.0
    %124 = vmatprep.subr.mxu0 0.0
    %125 = vmatpush1.xpose.msra.mxu0 0.0
    %126 = vmatprep.subr.mxu0 0.0
    %127 = vmatpush1.xpose.msra.mxu0 0.0
    %128 = vmatprep.subr.mxu0 0.0
    %129 = vmatpush1.xpose.msra.mxu0 0.0
    %130 = vmatprep.subr.mxu0 0.0
    %131 = vmatpush1.xpose.msra.mxu0 0.0
    %132 = vmatprep.subr.mxu0 0.0
    %133 = vmatpush1.xpose.msra.mxu0 0.0
    %134 = vmatprep.subr.mxu0 0.0
    %135 = vmatpush1.xpose.msra.mxu0 0.0
    %136 = vmatprep.subr.mxu0 0.0
    %137 = vmatpush1.xpose.msra.mxu0 0.0
    %138 = vmatprep.subr.mxu0 0.0
    %139 = vmatpush1.xpose.msra.mxu0 0.0
    %140 = vmatprep.subr.mxu0 0.0
    %141 = vmatpush1.xpose.msra.mxu0 0.0
    %142 = vmatprep.subr.mxu0 0.0
    %143 = vmatpush1.xpose.msra.mxu0 0.0
    %144 = vmatprep.subr.mxu0 0.0
    %145 = vmatpush1.xpose.msra.mxu0 %v112
    %146 = vmatprep.subr.mxu0 0.0
    %147 = vmatpush2.xpose.msra.mxu0 0.0
    %148 = vmatprep.subr.mxu0 0.0
    %149 = vmatpush2.xpose.msra.mxu0 0.0
    %150 = vmatprep.subr.mxu0 0.0
    %151 = vmatpush2.xpose.msra.mxu0 0.0
    %152 = vmatprep.subr.mxu0 0.0
    %153 = vmatpush2.xpose.msra.mxu0 0.0
    %154 = vmatprep.subr.mxu0 0.0
    %155 = vmatpush2.xpose.msra.mxu0 0.0
    %156 = vmatprep.subr.mxu0 0.0
    %157 = vmatpush2.xpose.msra.mxu0 0.0
    %158 = vmatprep.subr.mxu0 0.0
    %159 = vmatpush2.xpose.msra.mxu0 0.0
    %160 = vmatprep.subr.mxu0 0.0
    %161 = vmatpush2.xpose.msra.mxu0 0.0
    %162 = vmatprep.subr.mxu0 0.0
    %163 = vmatpush2.xpose.msra.mxu0 0.0
    %164 = vmatprep.subr.mxu0 0.0
    %165 = vmatpush2.xpose.msra.mxu0 0.0
    %166 = vmatprep.subr.mxu0 0.0
    %167 = vmatpush2.xpose.msra.mxu0 0.0
    %168 = vmatprep.subr.mxu0 0.0
    %169 = vmatpush2.xpose.msra.mxu0 0.0
    %170 = vmatprep.subr.mxu0 0.0
    %171 = vmatpush2.xpose.msra.mxu0 0.0
    %172 = vmatprep.subr.mxu0 0.0
    %173 = vmatpush2.xpose.msra.mxu0 0.0
    %174 = vmatprep.subr.mxu0 0.0
    %175 = vmatpush2.xpose.msra.mxu0 0.0
    %176 = vmatprep.subr.mxu0 0.0
    %177 = vmatpush2.xpose.msra.mxu0 0.0
    %178 = vmatprep.mubr.f32.mxu0 0.0
    %179 = vmatmul.mubr.f32.gmra.mxu0 %v88
    %v180 = vpop.f32.mrf.mxu0
    %v181 = vadd.f32 %v49, %v180
    %v182 = vpop.f32.mrf.mxu0
    %183 = vmatprep.mubr.f32.mxu0 0.0
    %184 = vmatmul.mubr.f32.gmra.mxu0 %v91
    %v185 = vpop.f32.mrf.mxu0
    %v186 = vadd.f32 %v54, %v185
    %v187 = vpop.f32.mrf.mxu0
    %188 = vmatprep.mubr.f32.mxu0 0.0
    %189 = vmatmul.mubr.f32.gmra.mxu0 %v94
    %v190 = vpop.f32.mrf.mxu0
    %v191 = vadd.f32 %v59, %v190
    %v192 = vpop.f32.mrf.mxu0
    %193 = vmatprep.mubr.f32.mxu0 0.0
    %194 = vmatmul.mubr.f32.gmra.mxu0 %v97
    %v195 = vpop.f32.mrf.mxu0
    %v196 = vadd.f32 %v64, %v195
    %v197 = vpop.f32.mrf.mxu0
    %198 = vmatprep.mubr.f32.mxu0 0.0
    %199 = vmatmul.mubr.f32.gmra.mxu0 %v100
    %v200 = vpop.f32.mrf.mxu0
    %v201 = vadd.f32 %v69, %v200
    %v202 = vpop.f32.mrf.mxu0
    %203 = vmatprep.mubr.f32.mxu0 0.0
    %204 = vmatmul.mubr.f32.gmra.mxu0 %v103
    %v205 = vpop.f32.mrf.mxu0
    %v206 = vadd.f32 %v74, %v205
    %v207 = vpop.f32.mrf.mxu0
    %208 = vmatprep.mubr.f32.mxu0 0.0
    %209 = vmatmul.mubr.f32.gmra.mxu0 %v106
    %v210 = vpop.f32.mrf.mxu0
    %v211 = vadd.f32 %v79, %v210
    %v212 = vpop.f32.mrf.mxu0
    %213 = vmatprep.mubr.f32.mxu0 0.0
    %214 = vmatmul.mubr.f32.gmra.mxu0 %v109
    %v215 = vpop.f32.mrf.mxu0
    %v216 = vadd.f32 %v84, %v215
    %v217 = vpop.f32.mrf.mxu0
    %218 = vdwg.mxu0
    %v219 = vmax.f32 %v181, 0.0
    %v220 = vmax.f32 %v186, 0.0
    %v221 = vmax.f32 %v191, 0.0
    %v222 = vmax.f32 %v196, 0.0
    %v223 = vmax.f32 %v201, 0.0
    %v224 = vmax.f32 %v206, 0.0
    %v225 = vmax.f32 %v211, 0.0
    %v226 = vmax.f32 %v216, 0.0
    %v227 = vld [vmem:[%s3] sm:$0xff]
    %v228 = vld [vmem:[%s3 + $0x8] sm:$0xff]
    %v229 = vld [vmem:[%s3 + $0x10] sm:$0xff]
    %v230 = vld [vmem:[%s3 + $0x18] sm:$0xff]
    %v231 = vld [vmem:[%s4] sm:$0xff]
    %v232 = vld [vmem:[%s4 + $0x8] sm:$0xff]
    %v233 = vld [vmem:[%s4 + $0x10] sm:$0xff]
    %v234 = vld [vmem:[%s4 + $0x18] sm:$0xff]
    %236 = vset.pattern.permute.xlu0 0
    %237 = vperm.xlu0 %236, %v231
    %v238 = vpop.permute.xlu0 %237
    %241 = vset.pattern.permute.xlu0 0
    %242 = vperm.xlu0 %241, %v232
    %v243 = vpop.permute.xlu0 %242
    %246 = vset.pattern.permute.xlu0 0
    %247 = vperm.xlu0 %246, %v233
    %v248 = vpop.permute.xlu0 %247
    %251 = vset.pattern.permute.xlu0 0
    %252 = vperm.xlu0 %251, %v234
    %v253 = vpop.permute.xlu0 %252
    %vm255 = vcmask 523264
    %v257 = vsel %vm255, %v227, 0
    %v260 = vsel %vm255, %v228, 0
    %v263 = vsel %vm255, %v229, 0
    %v266 = vsel %vm255, %v230, 0
    %268 = vmatprep.subr.mxu0 0.0
    %269 = vmatpush1.msra.mxu0 0.0
    %270 = vmatprep.subr.mxu0 0.0
    %271 = vmatpush1.msra.mxu0 0.0
    %272 = vmatprep.subr.mxu0 0.0
    %273 = vmatpush1.msra.mxu0 0.0
    %274 = vmatprep.subr.mxu0 0.0
    %275 = vmatpush1.msra.mxu0 0.0
    %276 = vmatprep.subr.mxu0 0.0
    %277 = vmatpush1.msra.mxu0 0.0
    %278 = vmatprep.subr.mxu0 0.0
    %279 = vmatpush1.msra.mxu0 0.0
    %280 = vmatprep.subr.mxu0 0.0
    %281 = vmatpush1.msra.mxu0 0.0
    %282 = vmatprep.subr.mxu0 0.0
    %283 = vmatpush1.msra.mxu0 0.0
    %284 = vmatprep.subr.mxu0 0.0
    %285 = vmatpush1.msra.mxu0 %v226
    %286 = vmatprep.subr.mxu0 0.0
    %287 = vmatpush1.msra.mxu0 %v225
    %288 = vmatprep.subr.mxu0 0.0
    %289 = vmatpush1.msra.mxu0 %v224
    %290 = vmatprep.subr.mxu0 0.0
    %291 = vmatpush1.msra.mxu0 %v223
    %292 = vmatprep.subr.mxu0 0.0
    %293 = vmatpush1.msra.mxu0 %v222
    %294 = vmatprep.subr.mxu0 0.0
    %295 = vmatpush1.msra.mxu0 %v221
    %296 = vmatprep.subr.mxu0 0.0
    %297 = vmatpush1.msra.mxu0 %v220
    %298 = vmatprep.subr.mxu0 0.0
    %299 = vmatpush1.msra.mxu0 %v219
    %300 = vmatprep.subr.mxu0 0.0
    %301 = vmatpush2.msra.mxu0 0.0
    %302 = vmatprep.subr.mxu0 0.0
    %303 = vmatpush2.msra.mxu0 0.0
    %304 = vmatprep.subr.mxu0 0.0
    %305 = vmatpush2.msra.mxu0 0.0
    %306 = vmatprep.subr.mxu0 0.0
    %307 = vmatpush2.msra.mxu0 0.0
    %308 = vmatprep.subr.mxu0 0.0
    %309 = vmatpush2.msra.mxu0 0.0
    %310 = vmatprep.subr.mxu0 0.0
    %311 = vmatpush2.msra.mxu0 0.0
    %312 = vmatprep.subr.mxu0 0.0
    %313 = vmatpush2.msra.mxu0 0.0
    %314 = vmatprep.subr.mxu0 0.0
    %315 = vmatpush2.msra.mxu0 0.0
    %316 = vmatprep.subr.mxu0 0.0
    %317 = vmatpush2.msra.mxu0 0.0
    %318 = vmatprep.subr.mxu0 0.0
    %319 = vmatpush2.msra.mxu0 0.0
    %320 = vmatprep.subr.mxu0 0.0
    %321 = vmatpush2.msra.mxu0 0.0
    %322 = vmatprep.subr.mxu0 0.0
    %323 = vmatpush2.msra.mxu0 0.0
    %324 = vmatprep.subr.mxu0 0.0
    %325 = vmatpush2.msra.mxu0 0.0
    %326 = vmatprep.subr.mxu0 0.0
    %327 = vmatpush2.msra.mxu0 0.0
    %328 = vmatprep.subr.mxu0 0.0
    %329 = vmatpush2.msra.mxu0 0.0
    %330 = vmatprep.subr.mxu0 0.0
    %331 = vmatpush2.msra.mxu0 0.0
    %332 = vmatprep.mubr.f32.mxu0 0.0
    %333 = vmatmul.mubr.f32.gmra.mxu0 %v257
    %v334 = vpop.f32.mrf.mxu0
    %v335 = vadd.f32 %v238, %v334
    %v336 = vpop.f32.mrf.mxu0
    %337 = vmatprep.mubr.f32.mxu0 0.0
    %338 = vmatmul.mubr.f32.gmra.mxu0 %v260
    %v339 = vpop.f32.mrf.mxu0
    %v340 = vadd.f32 %v243, %v339
    %v341 = vpop.f32.mrf.mxu0
    %342 = vmatprep.mubr.f32.mxu0 0.0
    %343 = vmatmul.mubr.f32.gmra.mxu0 %v263
    %v344 = vpop.f32.mrf.mxu0
    %v345 = vadd.f32 %v248, %v344
    %v346 = vpop.f32.mrf.mxu0
    %347 = vmatprep.mubr.f32.mxu0 0.0
    %348 = vmatmul.mubr.f32.gmra.mxu0 %v266
    %v349 = vpop.f32.mrf.mxu0
    %v350 = vadd.f32 %v253, %v349
    %v351 = vpop.f32.mrf.mxu0
    %352 = vdwg.mxu0
    %v353 = vmax.f32 %v335, 0.0
    %v354 = vmax.f32 %v340, 0.0
    %v355 = vmax.f32 %v345, 0.0
    %v356 = vmax.f32 %v350, 0.0
    %v357 = vld [vmem:[%s5] sm:$0xff]
    %v358 = vld [vmem:[%s5 + $0x8] sm:$0xff]
    %v359 = vld [vmem:[%s5 + $0x10] sm:$0xff]
    %v360 = vld [vmem:[%s5 + $0x18] sm:$0xff]
    %362 = vset.pattern.permute.xlu0 0
    %363 = vperm.xlu0 %362, %v357
    %v364 = vpop.permute.xlu0 %363
    %367 = vset.pattern.permute.xlu0 0
    %368 = vperm.xlu0 %367, %v358
    %v369 = vpop.permute.xlu0 %368
    %372 = vset.pattern.permute.xlu0 0
    %373 = vperm.xlu0 %372, %v359
    %v374 = vpop.permute.xlu0 %373
    %377 = vset.pattern.permute.xlu0 0
    %378 = vperm.xlu0 %377, %v360
    %v379 = vpop.permute.xlu0 %378
    %v381 = vmul.f32 %v364, %v353
    %v382 = vmul.f32 %v369, %v354
    %v383 = vmul.f32 %v374, %v355
    %v384 = vmul.f32 %v379, %v356
    %vm385 = vcmask 64512
    %v386 = vsel %vm385, %v381, 0.0
    %v387 = vsel %vm385, %v382, 0.0
    %v388 = vadd.f32 %v386, %v387
    %v389 = vsel %vm385, %v383, 0.0
    %v390 = vadd.f32 %v388, %v389
    %v391 = vsel %vm385, %v384, 0.0
    %v392 = vadd.f32 %v390, %v391
    %v393 = vrot.slane %v392, 4
    %v394 = vadd.f32 %v392, %v393
    %v395 = vrot.slane %v394, 2
    %v396 = vadd.f32 %v394, %v395
    %v397 = vrot.slane %v396, 1
    %v398 = vadd.f32 %v396, %v397
    %v399 = vld [vmem:[#allocation2] sm:$0x1]
    %401 = vset.pattern.permute.xlu0 0
    %402 = vperm.xlu0 %401, %v399
    %v403 = vpop.permute.xlu0 %402
    %v405 = vlaneseq
    %v406 = vshrl.u32 %v405, 7
    %v407 = vsub.s32 0, %v406
    %v408 = vrot.slane %v403, %v407
    %v409 = vadd.f32 %v398, %v408
    %v410 = vxor.u32 %v409, 2147483648
    %v411 = vmul.f32 %v410, 1.442695
    %v412 = vpow.pop %v411
    %v413 = vadd.f32 %v412, 1.0
    %v414 = vrcp.pop %v413
    %v415 = vmul.f32 1.0, %v414
    %vm416 = vcmask 57344
    %417 = vst.msk [vmem:[#allocation3] sm:$0x1] %vm416, %v415
    // Predicated region
    $region30: #{tpu_custom_call.1} parent=1 // pred_check
      _
    $region31: #{tpu_custom_call.1} parent=1 // pred_check_branch
      %419 = sbr.rel (0) target = $region33
    $region32: #{tpu_custom_call.1} parent=1 // pred_region
      %s421 = ssub.s32 16, 16
      %422 = vsyncadd [#allocation4], %s421
      %s424 = sshll.u32 [#allocation3], 4
      %s425 = int_to_ptr.vmem [resolvable:$true] %s424
      %427 = dma.vmem_to_hbm [thread:$0]  %s425, 16, %s7, [#allocation4]
    $region33: #{tpu_custom_call.1} parent=1 // pred_fallthru
      _
    // Predicated region
    $region34: #{tpu_custom_call.1} parent=1 // pred_check
      _
    $region35: #{tpu_custom_call.1} parent=1 // pred_check_branch
      %429 = sbr.rel (0) target = $region37
    $region36: #{tpu_custom_call.1} parent=1 // pred_region
      %430 = dma.done [#allocation4], 16
    $region37: #{tpu_custom_call.1} parent=1 // pred_fallthru
      _
    %431 = vsyncpa [#allocation4], 1

</llo_original>
